<compile_context>
chip_gen: v5e
topology: v5e:2x2
jax: 0.10.0
libtpu: 0.0.40
codegen_flags: <defaults>
</compile_context>

<pallas_src>
import functools
import math

import jax
import jax.numpy as jnp
from jax.experimental import pallas as pl
from jax.experimental.pallas import tpu as pltpu

HIDDEN_SIZE = 16

_T_CHUNK_MAX = 128   # timesteps per grid step (fully unrolled in-kernel)
_B_TILE_MAX = 128    # batch rows per MXU push (<= MXU height on all generations)


def rnn_head_kernel(x_ref, wih_ref, whh_ref, b_ref, wlin_ref, blin_ref, h0_ref,
                    out_ref, hN_ref, h_scr, *, seq_len):
    """One (batch tile, T chunk) grid step of the Elman RNN + linear head + sigmoid.

    x_ref    : (bT, tT)  chunk of the input sequence (input_size == 1 squeezed away)
    wih_ref  : (1, H)    W_ih^T (row vector, since input_size == 1)
    whh_ref  : (H, H)    W_hh^T
    b_ref    : (1, H)    b_ih + b_hh
    wlin_ref : (1, H)    linear.weight (row vector)
    blin_ref : (1, 1)    linear.bias
    h0_ref   : (bT, H)   initial hidden state for this batch tile
    out_ref  : (bT, 1)   sigmoid(linear(h_T))            (written on last T chunk)
    hN_ref   : (bT, H)   final hidden state h_T           (written on last T chunk)
    h_scr    : (bT, H)   persistent VMEM carry of h across T chunks
    """
    ti = pl.program_id(1)
    n_t = pl.num_programs(1)
    t_chunk = x_ref.shape[1]

    @pl.when(ti == 0)
    def _():
        h_scr[...] = h0_ref[...]

    # Loop-invariant loads (blocks are VMEM-resident across the whole grid).
    wih = wih_ref[...]                       # (1, H)
    whh = whh_ref[...]                       # (H, H)
    b = b_ref[...]                           # (1, H)

    x = x_ref[...]                           # (bT, tT)
    h = h_scr[...]                           # (bT, H)

    needs_mask = (seq_len % t_chunk) != 0    # static: only the ragged tail chunk masks
    base = ti * t_chunk

    # Fully unrolled recurrence over this chunk (t is static -> static lane slices of x,
    # and the scheduler can hoist the off-chain input projection ahead of the serial
    # matmul+tanh dependency chain).
    for t in range(t_chunk):
        # Input projection: exact because input_size == 1.
        xw_t = x[:, t:t + 1] * wih + b       # (bT, H), off the serial h chain
        # TODO(synk): per bundle-dump measurement, a small-B VPU formulation of the
        # 16x16 matmul could shave per-step latency if the MXU round trip binds.
        pre = xw_t + jnp.dot(h, whh, preferred_element_type=jnp.float32)
        h_new = jnp.tanh(pre)
        if needs_mask:
            h = jnp.where(base + t < seq_len, h_new, h)
        else:
            h = h_new

    h_scr[...] = h

    # TODO(synk): nn.Dropout(p=0.5) is applied to the per-step RNN outputs `tmp`, which
    # are never used in the returned values, so it is a no-op for this forward (eval mode).

    @pl.when(ti == n_t - 1)
    def _():
        hN_ref[...] = h
        # Head: N=1 output column -> lane reduce on VPU/XLU instead of a masked MXU matmul.
        logits = jnp.sum(h * wlin_ref[...], axis=-1, keepdims=True) + blin_ref[...]
        out_ref[...] = jax.nn.sigmoid(logits)


def simple_classification_rnn(seq, params, hc=None):
    """Pallas forward. seq: (B, T, 1) float32. Returns (out (B, 1), hc (1, B, H))."""
    B, T, I = seq.shape
    assert I == 1, "input_size must be 1"
    H = params["w_hh"].shape[0]

    if hc is None:
        hc = jnp.zeros((1, B, H), jnp.float32)

    # Free squeeze of the trailing size-1 dim (no transpose, no extra HBM traffic).
    x2d = seq.astype(jnp.float32).reshape(B, T)                    # (B, T)
    wih_t = params["w_ih"].reshape(1, H).astype(jnp.float32)       # W_ih^T : (1, H)
    whh_t = params["w_hh"].T.astype(jnp.float32)                   # W_hh^T : (H, H)
    b = (params["b_ih"] + params["b_hh"]).reshape(1, H).astype(jnp.float32)
    wlin = params["w_lin"].reshape(1, H).astype(jnp.float32)       # linear.weight row
    blin = params["b_lin"].reshape(1, 1).astype(jnp.float32)
    h0 = hc[-1].astype(jnp.float32)                                # (B, H)

    tT = min(T, _T_CHUNK_MAX)
    bT = min(B, _B_TILE_MAX)
    n_t = pl.cdiv(T, tT)
    n_b = pl.cdiv(B, bT)

    # VMEM budget: padded working set (double-buffered x chunks + tiny resident blocks)
    # plus headroom, clamped to stay well inside every generation's physical VMEM.
    def _pad(n, m):
        return ((n + m - 1) // m) * m

    lane_row = 128 * 4
    x_block_bytes = _pad(bT, 8) * _pad(tT, 128) * 4
    h_bytes = _pad(bT, 8) * lane_row
    w_bytes = _pad(H, 8) * lane_row
    working_set = 2 * x_block_bytes + 4 * h_bytes + 5 * w_bytes
    vmem_limit = int(min(max(2 * working_set + (2 << 20), 4 << 20), 64 << 20))

    kernel = functools.partial(rnn_head_kernel, seq_len=T)

    out, h_last = pl.pallas_call(
        kernel,
        out_shape=(jax.ShapeDtypeStruct((B, 1), jnp.float32),
                   jax.ShapeDtypeStruct((B, H), jnp.float32)),
        grid_spec=pltpu.PrefetchScalarGridSpec(
            num_scalar_prefetch=0,
            grid=(n_b, n_t),
            in_specs=[
                pl.BlockSpec((bT, tT), lambda bi, ti: (bi, ti)),   # x chunks stream along T
                pl.BlockSpec((1, H), lambda bi, ti: (0, 0)),       # W_ih^T (resident)
                pl.BlockSpec((H, H), lambda bi, ti: (0, 0)),       # W_hh^T (resident)
                pl.BlockSpec((1, H), lambda bi, ti: (0, 0)),       # b_ih + b_hh
                pl.BlockSpec((1, H), lambda bi, ti: (0, 0)),       # linear.weight
                pl.BlockSpec((1, 1), lambda bi, ti: (0, 0)),       # linear.bias
                pl.BlockSpec((bT, H), lambda bi, ti: (bi, 0)),     # h0 per batch tile
            ],
            out_specs=(pl.BlockSpec((bT, 1), lambda bi, ti: (bi, 0)),
                       pl.BlockSpec((bT, H), lambda bi, ti: (bi, 0))),
            scratch_shapes=[pltpu.VMEM((bT, H), jnp.float32)],      # persistent h carry
        ),
        compiler_params=pltpu.CompilerParams(
            dimension_semantics=("parallel", "arbitrary"),
            vmem_limit_bytes=vmem_limit),
    )(x2d, wih_t, whh_t, b, wlin, blin, h0)

    return out, h_last[None, :, :]                                 # hc: (1, B, H)


def init_params(key, hidden_size=HIDDEN_SIZE):
    """Deterministic init matching PyTorch shapes (uniform(-1/sqrt(H), 1/sqrt(H)))."""
    ks = jax.random.split(key, 6)
    bound = 1.0 / math.sqrt(hidden_size)
    u = lambda k, shape: jax.random.uniform(k, shape, jnp.float32, -bound, bound)
    return {
        "w_ih": u(ks[0], (hidden_size, 1)),            # rnn.weight_ih_l0
        "w_hh": u(ks[1], (hidden_size, hidden_size)),  # rnn.weight_hh_l0
        "b_ih": u(ks[2], (hidden_size,)),              # rnn.bias_ih_l0
        "b_hh": u(ks[3], (hidden_size,)),              # rnn.bias_hh_l0
        "w_lin": u(ks[4], (1, hidden_size)),           # linear.weight
        "b_lin": u(ks[5], (1,)),                       # linear.bias
    }


def reference_forward(seq, params, hc=None):
    """Pure-JAX reference of the PyTorch forward (eval mode)."""
    B, T, _ = seq.shape
    H = params["w_hh"].shape[0]
    h = jnp.zeros((B, H), jnp.float32) if hc is None else hc[-1]
    for t in range(T):
        x_t = seq[:, t, :]                                         # (B, 1)
        h = jnp.tanh(x_t @ params["w_ih"].T + params["b_ih"]
                     + h @ params["w_hh"].T + params["b_hh"])
    out = jax.nn.sigmoid(h @ params["w_lin"].T + params["b_lin"])
    return out, h[None]


if __name__ == "__main__":
    key = jax.random.PRNGKey(0)
    k_param, k_data = jax.random.split(key)

    B, T = 2, 8
    seq = jax.random.normal(k_data, (B, T, 1), jnp.float32)
    params = init_params(k_param, HIDDEN_SIZE)

    out, hc = simple_classification_rnn(seq, params)
    out = jax.block_until_ready(out)
    hc = jax.block_until_ready(hc)

    out_ref, hc_ref = reference_forward(seq, params)
    assert out.shape == (B, 1) and hc.shape == (1, B, HIDDEN_SIZE)
    assert jnp.allclose(out, out_ref, atol=1e-5, rtol=1e-5)
    assert jnp.allclose(hc, hc_ref, atol=1e-5, rtol=1e-5)

    print("KERNEL_OK")
</pallas_src>

<mosaic_0001>
module attributes {stable_mosaic.version = 11 : i64} {
  func.func @rnn_head_kernel(%arg0: i32, %arg1: i32, %arg2: memref<2x8xf32, #tpu.memory_space<vmem>>, %arg3: memref<1x16xf32, #tpu.memory_space<vmem>>, %arg4: memref<16x16xf32, #tpu.memory_space<vmem>>, %arg5: memref<1x16xf32, #tpu.memory_space<vmem>>, %arg6: memref<1x16xf32, #tpu.memory_space<vmem>>, %arg7: memref<1x1xf32, #tpu.memory_space<vmem>>, %arg8: memref<2x16xf32, #tpu.memory_space<vmem>>, %arg9: memref<2x1xf32, #tpu.memory_space<vmem>>, %arg10: memref<2x16xf32, #tpu.memory_space<vmem>>, %arg11: memref<2x16xf32, #tpu.memory_space<vmem>>) attributes {dimension_semantics = [#tpu.dimension_semantics<parallel>, #tpu.dimension_semantics<arbitrary>], iteration_bounds = array<i64: 1, 1>, scalar_prefetch = 0 : i64, scratch_operands = 1 : i64, tpu.core_type = #tpu.core_type<tc>, window_params = [{transform_indices = @transform_0, window_bounds = array<i64: 2, 8>}, {pipeline_mode = #tpu.pipeline_mode<synchronous>, transform_indices = @transform_1, window_bounds = array<i64: 1, 16>}, {pipeline_mode = #tpu.pipeline_mode<synchronous>, transform_indices = @transform_2, window_bounds = array<i64: 16, 16>}, {pipeline_mode = #tpu.pipeline_mode<synchronous>, transform_indices = @transform_3, window_bounds = array<i64: 1, 16>}, {pipeline_mode = #tpu.pipeline_mode<synchronous>, transform_indices = @transform_4, window_bounds = array<i64: 1, 16>}, {pipeline_mode = #tpu.pipeline_mode<synchronous>, transform_indices = @transform_5, window_bounds = array<i64: 1, 1>}, {transform_indices = @transform_6, window_bounds = array<i64: 2, 16>}, {transform_indices = @transform_7, window_bounds = array<i64: 2, 1>}, {transform_indices = @transform_8, window_bounds = array<i64: 2, 16>}]} {
    %c0_i32 = arith.constant 0 : i32
    %0 = arith.cmpi eq, %arg1, %c0_i32 : i32
    %1 = arith.extui %0 : i1 to i32
    %c0_i32_0 = arith.constant 0 : i32
    %2 = arith.cmpi ne, %1, %c0_i32_0 : i32
    scf.if %2 {
      %c0_21 = arith.constant 0 : index
      %c0_22 = arith.constant 0 : index
      %84 = vector.load %arg8[%c0_21, %c0_22] : memref<2x16xf32, #tpu.memory_space<vmem>>, vector<2x16xf32>
      %c0_23 = arith.constant 0 : index
      %c0_24 = arith.constant 0 : index
      %85 = vector.load %arg11[%c0_23, %c0_24] : memref<2x16xf32, #tpu.memory_space<vmem>>, vector<2x16xf32>
      tpu.vector_store %arg11[%c0_23, %c0_24], %84 {strides = array<i32>} : memref<2x16xf32, #tpu.memory_space<vmem>>, vector<2x16xf32>,
    } else {
    }
    %c0 = arith.constant 0 : index
    %c0_1 = arith.constant 0 : index
    %3 = vector.load %arg3[%c0, %c0_1] : memref<1x16xf32, #tpu.memory_space<vmem>>, vector<1x16xf32>
    %c0_2 = arith.constant 0 : index
    %c0_3 = arith.constant 0 : index
    %4 = vector.load %arg4[%c0_2, %c0_3] : memref<16x16xf32, #tpu.memory_space<vmem>>, vector<16x16xf32>
    %c0_4 = arith.constant 0 : index
    %c0_5 = arith.constant 0 : index
    %5 = vector.load %arg5[%c0_4, %c0_5] : memref<1x16xf32, #tpu.memory_space<vmem>>, vector<1x16xf32>
    %c0_6 = arith.constant 0 : index
    %c0_7 = arith.constant 0 : index
    %6 = vector.load %arg2[%c0_6, %c0_7] : memref<2x8xf32, #tpu.memory_space<vmem>>, vector<2x8xf32>
    %c0_8 = arith.constant 0 : index
    %c0_9 = arith.constant 0 : index
    %7 = vector.load %arg11[%c0_8, %c0_9] : memref<2x16xf32, #tpu.memory_space<vmem>>, vector<2x16xf32>
    %8 = vector.extract_strided_slice %6 {offsets = [0, 0], sizes = [2, 1], strides = [1, 1]} : vector<2x8xf32> to vector<2x1xf32>
    %9 = vector.broadcast %8 : vector<2x1xf32> to vector<2x16xf32>
    %10 = vector.broadcast %3 : vector<1x16xf32> to vector<2x16xf32>
    %11 = arith.mulf %9, %10 : vector<2x16xf32>
    %12 = vector.broadcast %5 : vector<1x16xf32> to vector<2x16xf32>
    %13 = arith.addf %11, %12 : vector<2x16xf32>
    %cst = arith.constant dense<0.000000e+00> : vector<2x16xf32>
    %14 = tpu.matmul %7, %4, %cst {dimension_numbers = #tpu.dot_dimension_numbers<[1], [0], [0], [1], [0, 0, 1, 1], [], []>} : vector<2x16xf32>, vector<16x16xf32>, vector<2x16xf32> -> vector<2x16xf32>
    %15 = arith.addf %13, %14 : vector<2x16xf32>
    %16 = math.tanh %15 : vector<2x16xf32>
    %17 = vector.extract_strided_slice %6 {offsets = [0, 1], sizes = [2, 1], strides = [1, 1]} : vector<2x8xf32> to vector<2x1xf32>
    %18 = vector.broadcast %17 : vector<2x1xf32> to vector<2x16xf32>
    %19 = vector.broadcast %3 : vector<1x16xf32> to vector<2x16xf32>
    %20 = arith.mulf %18, %19 : vector<2x16xf32>
    %21 = vector.broadcast %5 : vector<1x16xf32> to vector<2x16xf32>
    %22 = arith.addf %20, %21 : vector<2x16xf32>
    %cst_10 = arith.constant dense<0.000000e+00> : vector<2x16xf32>
    %23 = tpu.matmul %16, %4, %cst_10 {dimension_numbers = #tpu.dot_dimension_numbers<[1], [0], [0], [1], [0, 0, 1, 1], [], []>} : vector<2x16xf32>, vector<16x16xf32>, vector<2x16xf32> -> vector<2x16xf32>
    %24 = arith.addf %22, %23 : vector<2x16xf32>
    %25 = math.tanh %24 : vector<2x16xf32>
    %26 = vector.extract_strided_slice %6 {offsets = [0, 2], sizes = [2, 1], strides = [1, 1]} : vector<2x8xf32> to vector<2x1xf32>
    %27 = vector.broadcast %26 : vector<2x1xf32> to vector<2x16xf32>
    %28 = vector.broadcast %3 : vector<1x16xf32> to vector<2x16xf32>
    %29 = arith.mulf %27, %28 : vector<2x16xf32>
    %30 = vector.broadcast %5 : vector<1x16xf32> to vector<2x16xf32>
    %31 = arith.addf %29, %30 : vector<2x16xf32>
    %cst_11 = arith.constant dense<0.000000e+00> : vector<2x16xf32>
    %32 = tpu.matmul %25, %4, %cst_11 {dimension_numbers = #tpu.dot_dimension_numbers<[1], [0], [0], [1], [0, 0, 1, 1], [], []>} : vector<2x16xf32>, vector<16x16xf32>, vector<2x16xf32> -> vector<2x16xf32>
    %33 = arith.addf %31, %32 : vector<2x16xf32>
    %34 = math.tanh %33 : vector<2x16xf32>
    %35 = vector.extract_strided_slice %6 {offsets = [0, 3], sizes = [2, 1], strides = [1, 1]} : vector<2x8xf32> to vector<2x1xf32>
    %36 = vector.broadcast %35 : vector<2x1xf32> to vector<2x16xf32>
    %37 = vector.broadcast %3 : vector<1x16xf32> to vector<2x16xf32>
    %38 = arith.mulf %36, %37 : vector<2x16xf32>
    %39 = vector.broadcast %5 : vector<1x16xf32> to vector<2x16xf32>
    %40 = arith.addf %38, %39 : vector<2x16xf32>
    %cst_12 = arith.constant dense<0.000000e+00> : vector<2x16xf32>
    %41 = tpu.matmul %34, %4, %cst_12 {dimension_numbers = #tpu.dot_dimension_numbers<[1], [0], [0], [1], [0, 0, 1, 1], [], []>} : vector<2x16xf32>, vector<16x16xf32>, vector<2x16xf32> -> vector<2x16xf32>
    %42 = arith.addf %40, %41 : vector<2x16xf32>
    %43 = math.tanh %42 : vector<2x16xf32>
    %44 = vector.extract_strided_slice %6 {offsets = [0, 4], sizes = [2, 1], strides = [1, 1]} : vector<2x8xf32> to vector<2x1xf32>
    %45 = vector.broadcast %44 : vector<2x1xf32> to vector<2x16xf32>
    %46 = vector.broadcast %3 : vector<1x16xf32> to vector<2x16xf32>
    %47 = arith.mulf %45, %46 : vector<2x16xf32>
    %48 = vector.broadcast %5 : vector<1x16xf32> to vector<2x16xf32>
    %49 = arith.addf %47, %48 : vector<2x16xf32>
    %cst_13 = arith.constant dense<0.000000e+00> : vector<2x16xf32>
    %50 = tpu.matmul %43, %4, %cst_13 {dimension_numbers = #tpu.dot_dimension_numbers<[1], [0], [0], [1], [0, 0, 1, 1], [], []>} : vector<2x16xf32>, vector<16x16xf32>, vector<2x16xf32> -> vector<2x16xf32>
    %51 = arith.addf %49, %50 : vector<2x16xf32>
    %52 = math.tanh %51 : vector<2x16xf32>
    %53 = vector.extract_strided_slice %6 {offsets = [0, 5], sizes = [2, 1], strides = [1, 1]} : vector<2x8xf32> to vector<2x1xf32>
    %54 = vector.broadcast %53 : vector<2x1xf32> to vector<2x16xf32>
    %55 = vector.broadcast %3 : vector<1x16xf32> to vector<2x16xf32>
    %56 = arith.mulf %54, %55 : vector<2x16xf32>
    %57 = vector.broadcast %5 : vector<1x16xf32> to vector<2x16xf32>
    %58 = arith.addf %56, %57 : vector<2x16xf32>
    %cst_14 = arith.constant dense<0.000000e+00> : vector<2x16xf32>
    %59 = tpu.matmul %52, %4, %cst_14 {dimension_numbers = #tpu.dot_dimension_numbers<[1], [0], [0], [1], [0, 0, 1, 1], [], []>} : vector<2x16xf32>, vector<16x16xf32>, vector<2x16xf32> -> vector<2x16xf32>
    %60 = arith.addf %58, %59 : vector<2x16xf32>
    %61 = math.tanh %60 : vector<2x16xf32>
    %62 = vector.extract_strided_slice %6 {offsets = [0, 6], sizes = [2, 1], strides = [1, 1]} : vector<2x8xf32> to vector<2x1xf32>
    %63 = vector.broadcast %62 : vector<2x1xf32> to vector<2x16xf32>
    %64 = vector.broadcast %3 : vector<1x16xf32> to vector<2x16xf32>
    %65 = arith.mulf %63, %64 : vector<2x16xf32>
    %66 = vector.broadcast %5 : vector<1x16xf32> to vector<2x16xf32>
    %67 = arith.addf %65, %66 : vector<2x16xf32>
    %cst_15 = arith.constant dense<0.000000e+00> : vector<2x16xf32>
    %68 = tpu.matmul %61, %4, %cst_15 {dimension_numbers = #tpu.dot_dimension_numbers<[1], [0], [0], [1], [0, 0, 1, 1], [], []>} : vector<2x16xf32>, vector<16x16xf32>, vector<2x16xf32> -> vector<2x16xf32>
    %69 = arith.addf %67, %68 : vector<2x16xf32>
    %70 = math.tanh %69 : vector<2x16xf32>
    %71 = vector.extract_strided_slice %6 {offsets = [0, 7], sizes = [2, 1], strides = [1, 1]} : vector<2x8xf32> to vector<2x1xf32>
    %72 = vector.broadcast %71 : vector<2x1xf32> to vector<2x16xf32>
    %73 = vector.broadcast %3 : vector<1x16xf32> to vector<2x16xf32>
    %74 = arith.mulf %72, %73 : vector<2x16xf32>
    %75 = vector.broadcast %5 : vector<1x16xf32> to vector<2x16xf32>
    %76 = arith.addf %74, %75 : vector<2x16xf32>
    %cst_16 = arith.constant dense<0.000000e+00> : vector<2x16xf32>
    %77 = tpu.matmul %70, %4, %cst_16 {dimension_numbers = #tpu.dot_dimension_numbers<[1], [0], [0], [1], [0, 0, 1, 1], [], []>} : vector<2x16xf32>, vector<16x16xf32>, vector<2x16xf32> -> vector<2x16xf32>
    %78 = arith.addf %76, %77 : vector<2x16xf32>
    %79 = math.tanh %78 : vector<2x16xf32>
    %c0_17 = arith.constant 0 : index
    %c0_18 = arith.constant 0 : index
    %80 = vector.load %arg11[%c0_17, %c0_18] : memref<2x16xf32, #tpu.memory_space<vmem>>, vector<2x16xf32>
    tpu.vector_store %arg11[%c0_17, %c0_18], %79 {strides = array<i32>} : memref<2x16xf32, #tpu.memory_space<vmem>>, vector<2x16xf32>,
    %c0_i32_19 = arith.constant 0 : i32
    %81 = arith.cmpi eq, %arg1, %c0_i32_19 : i32
    %82 = arith.extui %81 : i1 to i32
    %c0_i32_20 = arith.constant 0 : i32
    %83 = arith.cmpi ne, %82, %c0_i32_20 : i32
    scf.if %83 {
      %c0_21 = arith.constant 0 : index
      %c0_22 = arith.constant 0 : index
      %84 = vector.load %arg10[%c0_21, %c0_22] : memref<2x16xf32, #tpu.memory_space<vmem>>, vector<2x16xf32>
      tpu.vector_store %arg10[%c0_21, %c0_22], %79 {strides = array<i32>} : memref<2x16xf32, #tpu.memory_space<vmem>>, vector<2x16xf32>,
      %c0_23 = arith.constant 0 : index
      %c0_24 = arith.constant 0 : index
      %85 = vector.load %arg6[%c0_23, %c0_24] : memref<1x16xf32, #tpu.memory_space<vmem>>, vector<1x16xf32>
      %86 = vector.broadcast %85 : vector<1x16xf32> to vector<2x16xf32>
      %87 = arith.mulf %79, %86 : vector<2x16xf32>
      %cst_25 = arith.constant dense<0.000000e+00> : vector<2xf32>
      %88 = vector.multi_reduction <add>, %87, %cst_25 [1] : vector<2x16xf32> to vector<2xf32>
      %89 = vector.shape_cast %88 : vector<2xf32> to vector<2x1xf32>
      %c0_26 = arith.constant 0 : index
      %c0_27 = arith.constant 0 : index
      %90 = vector.load %arg7[%c0_26, %c0_27] : memref<1x1xf32, #tpu.memory_space<vmem>>, vector<1x1xf32>
      %91 = vector.broadcast %90 : vector<1x1xf32> to vector<2x1xf32>
      %92 = arith.addf %89, %91 : vector<2x1xf32>
      %93 = arith.negf %92 : vector<2x1xf32>
      %94 = math.exp %93 : vector<2x1xf32>
      %cst_28 = arith.constant 1.000000e+00 : f32
      %95 = vector.broadcast %cst_28 : f32 to vector<2x1xf32>
      %96 = arith.addf %95, %94 : vector<2x1xf32>
      %97 = arith.divf %95, %96 : vector<2x1xf32>
      %c0_29 = arith.constant 0 : index
      %c0_30 = arith.constant 0 : index
      %98 = vector.load %arg9[%c0_29, %c0_30] : memref<2x1xf32, #tpu.memory_space<vmem>>, vector<2x1xf32>
      tpu.vector_store %arg9[%c0_29, %c0_30], %97 {strides = array<i32>} : memref<2x1xf32, #tpu.memory_space<vmem>>, vector<2x1xf32>,
    } else {
    }
    return
  }
  func.func @transform_0(%arg0: i32, %arg1: i32) -> (i32, i32) {
    %c0_i32 = arith.constant 0 : i32
    return %arg0, %arg1 : i32, i32
  }
  func.func @transform_1(%arg0: i32, %arg1: i32) -> (i32, i32) {
    %c0_i32 = arith.constant 0 : i32
    %c0_i32_0 = arith.constant 0 : i32
    %c0_i32_1 = arith.constant 0 : i32
    return %c0_i32, %c0_i32_0 : i32, i32
  }
  func.func @transform_2(%arg0: i32, %arg1: i32) -> (i32, i32) {
    %c0_i32 = arith.constant 0 : i32
    %c0_i32_0 = arith.constant 0 : i32
    %c0_i32_1 = arith.constant 0 : i32
    return %c0_i32, %c0_i32_0 : i32, i32
  }
  func.func @transform_3(%arg0: i32, %arg1: i32) -> (i32, i32) {
    %c0_i32 = arith.constant 0 : i32
    %c0_i32_0 = arith.constant 0 : i32
    %c0_i32_1 = arith.constant 0 : i32
    return %c0_i32, %c0_i32_0 : i32, i32
  }
  func.func @transform_4(%arg0: i32, %arg1: i32) -> (i32, i32) {
    %c0_i32 = arith.constant 0 : i32
    %c0_i32_0 = arith.constant 0 : i32
    %c0_i32_1 = arith.constant 0 : i32
    return %c0_i32, %c0_i32_0 : i32, i32
  }
  func.func @transform_5(%arg0: i32, %arg1: i32) -> (i32, i32) {
    %c0_i32 = arith.constant 0 : i32
    %c0_i32_0 = arith.constant 0 : i32
    %c0_i32_1 = arith.constant 0 : i32
    return %c0_i32, %c0_i32_0 : i32, i32
  }
  func.func @transform_6(%arg0: i32, %arg1: i32) -> (i32, i32) {
    %c0_i32 = arith.constant 0 : i32
    %c0_i32_0 = arith.constant 0 : i32
    return %arg0, %c0_i32 : i32, i32
  }
  func.func @transform_7(%arg0: i32, %arg1: i32) -> (i32, i32) {
    %c0_i32 = arith.constant 0 : i32
    %c0_i32_0 = arith.constant 0 : i32
    return %arg0, %c0_i32 : i32, i32
  }
  func.func @transform_8(%arg0: i32, %arg1: i32) -> (i32, i32) {
    %c0_i32 = arith.constant 0 : i32
    %c0_i32_0 = arith.constant 0 : i32
    return %arg0, %c0_i32 : i32, i32
  }
}

</mosaic_0001>

<llo_original>
// kernel: tpu_custom_call.1
$region0: #{tpu_custom_call.1}
  #allocation0 [shape = 'u32[]', space=smem, size = 0x4, offset = 0x4, fixed_abs, tag = 'smem constant byte address 0x4 - core index']
  #allocation1 [shape = 'u32[72,128]{1,0:T(1,128)}', space=vmem, size = 0x9000, scoped, tag = 'internal scratch']
  #allocation2 [shape = 'f32[2,16]{1,0:T(2,128)}', space=vmem, size = 0x400, scoped, tag = 'scratch operand']
  #allocation3 [shape = 'f32[1,1]{1,0:T(1,128)S(1)}', space=vmem, size = 0x200, scoped, tag = 'scoped memory for tpu_custom_call.1']
  %s0 = inlined_call_operand.vmem [shape: f32[2,8], index: 0, kind: input, shape index: {}]
  %s1 = inlined_call_operand.hbm [shape: f32[1,16], index: 1, kind: input, shape index: {}]
  %s2 = inlined_call_operand.hbm [shape: f32[16,16], index: 2, kind: input, shape index: {}]
  %s3 = inlined_call_operand.hbm [shape: f32[1,16], index: 3, kind: input, shape index: {}]
  %s4 = inlined_call_operand.vmem [shape: f32[1,16], index: 4, kind: input, shape index: {}]
  %s5 = inlined_call_operand.<no memory space> [shape: f32[1,1], index: 5, kind: input, shape index: {}]
  %s6 = inlined_call_operand.vmem [shape: f32[2,16], index: 6, kind: input, shape index: {}]
  %s7 = inlined_call_operand.vmem [shape: f32[2,1], index: 7, kind: output, shape index: {0}]
  %s8 = inlined_call_operand.hbm [shape: f32[2,16], index: 8, kind: output, shape index: {1}]
  %9 = xla_tuple %s7, %s8
  %s10 = sld [smem:[#allocation0]]
  $region66: #{tpu_custom_call.1} parent=0
    _
  %s12 = ssub.s32 1, %s10
  %s13 = scalar_select 0, %s12, %s10
  %v14 = vstv %s5
  %15 = vst [vmem:[#allocation3] sm:$0x1] %v14
  $region1: #{tpu_custom_call.1} parent=0
    #allocation4 [shape = 'u8[512]{0}', space=vmem, size = 0x400, scoped, tag = 'input window, operand 1, single buffered']
    #allocation5 [shape = 's32[1]{0}', space=sflag, size = 0x4, scoped, tag = 'scoped memory for tpu_custom_call.1']
    #allocation6 [shape = 's32[1]{0}', space=sflag, size = 0x4, scoped, tag = 'scoped memory for tpu_custom_call.1']
    #allocation7 [shape = 'u8[8192]{0}', space=vmem, size = 0x2000, scoped, tag = 'input window, operand 2, single buffered']
    #allocation8 [shape = 's32[1]{0}', space=sflag, size = 0x4, scoped, tag = 'scoped memory for tpu_custom_call.1']
    #allocation9 [shape = 'u8[512]{0}', space=vmem, size = 0x400, scoped, tag = 'input window, operand 3, single buffered']
    #allocation10 [shape = 'u8[1024]{0}', space=vmem, size = 0x400, scoped, tag = 'output window, operand 1, single buffered']
    %16 = vsyncpa [#allocation5], 0
    %17 = vsyncpa [#allocation8], 0
    %18 = vsyncpa [#allocation6], 0
    // Predicated region
    $region2: #{tpu_custom_call.1} parent=1 // pred_check
      _
    $region3: #{tpu_custom_call.1} parent=1 // pred_check_branch
      %20 = sbr.rel (0) target = $region5
    $region4: #{tpu_custom_call.1} parent=1 // pred_region
      _
    $region5: #{tpu_custom_call.1} parent=1 // pred_fallthru
      _
    // Predicated region
    $region6: #{tpu_custom_call.1} parent=1 // pred_check
      _
    $region7: #{tpu_custom_call.1} parent=1 // pred_check_branch
      %22 = sbr.rel (0) target = $region9
    $region8: #{tpu_custom_call.1} parent=1 // pred_region
      %24 = vsyncadd [#allocation5], 0
      %s26 = sshll.u32 %s1, 4
      %s27 = int_to_ptr.hbm [resolvable:$true] %s26
      %s28 = sshll.u32 [#allocation4], 4
      %s29 = int_to_ptr.vmem [resolvable:$true] %s28
      %31 = dma.hbm_to_vmem [thread:$0]  %s27, 16, %s29, [#allocation5]
    $region9: #{tpu_custom_call.1} parent=1 // pred_fallthru
      _
    // Predicated region
    $region10: #{tpu_custom_call.1} parent=1 // pred_check
      _
    $region11: #{tpu_custom_call.1} parent=1 // pred_check_branch
      %33 = sbr.rel (0) target = $region13
    $region12: #{tpu_custom_call.1} parent=1 // pred_region
      %35 = vsyncadd [#allocation8], 0
      %s36 = sshll.u32 %s2, 4
      %s37 = int_to_ptr.hbm [resolvable:$true] %s36
      %s38 = sshll.u32 [#allocation7], 4
      %s39 = int_to_ptr.vmem [resolvable:$true] %s38
      %44 = dma.hbm_to_vmem [thread:$0]  %s37, 256, %s39, [#allocation8], 128, 128, 8
    $region13: #{tpu_custom_call.1} parent=1 // pred_fallthru
      _
    // Predicated region
    $region14: #{tpu_custom_call.1} parent=1 // pred_check
      _
    $region15: #{tpu_custom_call.1} parent=1 // pred_check_branch
      %46 = sbr.rel (0) target = $region17
    $region16: #{tpu_custom_call.1} parent=1 // pred_region
      %48 = vsyncadd [#allocation8], 0
      %s50 = sshll.u32 %s3, 4
      %s51 = int_to_ptr.hbm [resolvable:$true] %s50
      %s52 = sshll.u32 [#allocation9], 4
      %s53 = int_to_ptr.vmem [resolvable:$true] %s52
      %55 = dma.hbm_to_vmem [thread:$0]  %s51, 16, %s53, [#allocation8]
    $region17: #{tpu_custom_call.1} parent=1 // pred_fallthru
      _
    // Predicated region
    $region18: #{tpu_custom_call.1} parent=1 // pred_check
      _
    $region19: #{tpu_custom_call.1} parent=1 // pred_check_branch
      %57 = sbr.rel (0) target = $region21
    $region20: #{tpu_custom_call.1} parent=1 // pred_region
      _
    $region21: #{tpu_custom_call.1} parent=1 // pred_fallthru
      _
    // Predicated region
    $region22: #{tpu_custom_call.1} parent=1 // pred_check
      _
    $region23: #{tpu_custom_call.1} parent=1 // pred_check_branch
      %59 = sbr.rel (0) target = $region25
    $region24: #{tpu_custom_call.1} parent=1 // pred_region
      _
    $region25: #{tpu_custom_call.1} parent=1 // pred_fallthru
      _
    // Predicated region
    $region26: #{tpu_custom_call.1} parent=1 // pred_check
      _
    $region27: #{tpu_custom_call.1} parent=1 // pred_check_branch
      %61 = sbr.rel (0) target = $region29
    $region28: #{tpu_custom_call.1} parent=1 // pred_region
      _
    $region29: #{tpu_custom_call.1} parent=1 // pred_fallthru
      _
    // Predicated region
    $region30: #{tpu_custom_call.1} parent=1 // pred_check
      _
    $region31: #{tpu_custom_call.1} parent=1 // pred_check_branch
      %63 = sbr.rel (0) target = $region33
    $region32: #{tpu_custom_call.1} parent=1 // pred_region
      %65 = dma.done [#allocation5], 16
    $region33: #{tpu_custom_call.1} parent=1 // pred_fallthru
      _
    // Predicated region
    $region34: #{tpu_custom_call.1} parent=1 // pred_check
      _
    $region35: #{tpu_custom_call.1} parent=1 // pred_check_branch
      %67 = sbr.rel (0) target = $region37
    $region36: #{tpu_custom_call.1} parent=1 // pred_region
      %69 = dma.done [#allocation8], 256
    $region37: #{tpu_custom_call.1} parent=1 // pred_fallthru
      _
    // Predicated region
    $region38: #{tpu_custom_call.1} parent=1 // pred_check
      _
    $region39: #{tpu_custom_call.1} parent=1 // pred_check_branch
      %71 = sbr.rel (0) target = $region41
    $region40: #{tpu_custom_call.1} parent=1 // pred_region
      %73 = dma.done [#allocation8], 16
    $region41: #{tpu_custom_call.1} parent=1 // pred_fallthru
      _
    %p74 = scmp.eq.s32.totalorder 0, 0
    // Predicated region
    $region42: #{tpu_custom_call.1} parent=1 // pred_check
      %p75 = pneg %p74
    $region43: #{tpu_custom_call.1} parent=1 // pred_check_branch
      %77 = sbr.rel (%p75) target = $region45
    $region44: #{tpu_custom_call.1} parent=1 // pred_region
      %v78 = vld [vmem:[%s6] sm:$0x3]
      %vm79 = vcmask 123904
      %80 = vst.msk [vmem:[#allocation2] sm:$0x3] %vm79, %v78
    $region45: #{tpu_custom_call.1} parent=1 // pred_fallthru
      _
    %v81 = vld [vmem:[#allocation4] sm:$0x1]
    %v82 = vld [vmem:[#allocation7] sm:$0xff]
    %v83 = vld [vmem:[#allocation7 + $0x8] sm:$0xff]
    %v84 = vld [vmem:[#allocation9] sm:$0x1]
    %v85 = vld [vmem:[%s0] sm:$0x3]
    %v86 = vld [vmem:[#allocation2] sm:$0x3]
    %88 = vset.pattern.permute.xlu0 0
    %89 = vperm.xlu0 %88, %v85
    %v90 = vpop.permute.xlu0 %89
    %v93 = vperm.slane %v81, 0
    %v95 = vmul.f32 %v90, %v93
    %v97 = vperm.slane %v84, 0
    %v99 = vadd.f32 %v95, %v97
    %vm100 = vcmask 130048
    %v102 = vsel %vm100, %v86, 0
    %104 = vmatpush.msra.mxu0 0.0
    %105 = vmatpush.msra.mxu0 0.0
    %106 = vmatpush.msra.mxu0 0.0
    %107 = vmatpush.msra.mxu0 0.0
    %108 = vmatpush.msra.mxu0 0.0
    %109 = vmatpush.msra.mxu0 0.0
    %110 = vmatpush.msra.mxu0 0.0
    %111 = vmatpush.msra.mxu0 0.0
    %112 = vmatpush.msra.mxu0 0.0
    %113 = vmatpush.msra.mxu0 0.0
    %114 = vmatpush.msra.mxu0 0.0
    %115 = vmatpush.msra.mxu0 0.0
    %116 = vmatpush.msra.mxu0 0.0
    %117 = vmatpush.msra.mxu0 0.0
    %118 = vmatpush.msra.mxu0 %v83
    %119 = vmatpush.msra.mxu0 %v82
    %120 = vmatmul.f32.gmra.mxu0 %v102
    %v121 = vpop.f32.mrf.mxu0
    %v122 = vadd.f32 0.0, %v121
    %123 = vdwg.mxu0
    %v124 = vadd.f32 %v99, %v122
    %v125 = vtanh.pop %v124
    %126 = vset.pattern.permute.xlu0 1
    %127 = vperm.xlu0 %126, %v85
    %v128 = vpop.permute.xlu0 %127
    %v130 = vmul.f32 %v128, %v93
    %v131 = vadd.f32 %v130, %v97
    %v133 = vsel %vm100, %v125, 0
    %135 = vmatpush.msra.mxu0 0.0
    %136 = vmatpush.msra.mxu0 0.0
    %137 = vmatpush.msra.mxu0 0.0
    %138 = vmatpush.msra.mxu0 0.0
    %139 = vmatpush.msra.mxu0 0.0
    %140 = vmatpush.msra.mxu0 0.0
    %141 = vmatpush.msra.mxu0 0.0
    %142 = vmatpush.msra.mxu0 0.0
    %143 = vmatpush.msra.mxu0 0.0
    %144 = vmatpush.msra.mxu0 0.0
    %145 = vmatpush.msra.mxu0 0.0
    %146 = vmatpush.msra.mxu0 0.0
    %147 = vmatpush.msra.mxu0 0.0
    %148 = vmatpush.msra.mxu0 0.0
    %149 = vmatpush.msra.mxu0 %v83
    %150 = vmatpush.msra.mxu0 %v82
    %151 = vmatmul.f32.gmra.mxu0 %v133
    %v152 = vpop.f32.mrf.mxu0
    %v153 = vadd.f32 0.0, %v152
    %154 = vdwg.mxu0
    %v155 = vadd.f32 %v131, %v153
    %v156 = vtanh.pop %v155
    %157 = vset.pattern.permute.xlu0 2
    %158 = vperm.xlu0 %157, %v85
    %v159 = vpop.permute.xlu0 %158
    %v161 = vmul.f32 %v159, %v93
    %v162 = vadd.f32 %v161, %v97
    %v164 = vsel %vm100, %v156, 0
    %166 = vmatpush.msra.mxu0 0.0
    %167 = vmatpush.msra.mxu0 0.0
    %168 = vmatpush.msra.mxu0 0.0
    %169 = vmatpush.msra.mxu0 0.0
    %170 = vmatpush.msra.mxu0 0.0
    %171 = vmatpush.msra.mxu0 0.0
    %172 = vmatpush.msra.mxu0 0.0
    %173 = vmatpush.msra.mxu0 0.0
    %174 = vmatpush.msra.mxu0 0.0
    %175 = vmatpush.msra.mxu0 0.0
    %176 = vmatpush.msra.mxu0 0.0
    %177 = vmatpush.msra.mxu0 0.0
    %178 = vmatpush.msra.mxu0 0.0
    %179 = vmatpush.msra.mxu0 0.0
    %180 = vmatpush.msra.mxu0 %v83
    %181 = vmatpush.msra.mxu0 %v82
    %182 = vmatmul.f32.gmra.mxu0 %v164
    %v183 = vpop.f32.mrf.mxu0
    %v184 = vadd.f32 0.0, %v183
    %185 = vdwg.mxu0
    %v186 = vadd.f32 %v162, %v184
    %v187 = vtanh.pop %v186
    %188 = vset.pattern.permute.xlu0 3
    %189 = vperm.xlu0 %188, %v85
    %v190 = vpop.permute.xlu0 %189
    %v192 = vmul.f32 %v190, %v93
    %v193 = vadd.f32 %v192, %v97
    %v195 = vsel %vm100, %v187, 0
    %197 = vmatpush.msra.mxu0 0.0
    %198 = vmatpush.msra.mxu0 0.0
    %199 = vmatpush.msra.mxu0 0.0
    %200 = vmatpush.msra.mxu0 0.0
    %201 = vmatpush.msra.mxu0 0.0
    %202 = vmatpush.msra.mxu0 0.0
    %203 = vmatpush.msra.mxu0 0.0
    %204 = vmatpush.msra.mxu0 0.0
    %205 = vmatpush.msra.mxu0 0.0
    %206 = vmatpush.msra.mxu0 0.0
    %207 = vmatpush.msra.mxu0 0.0
    %208 = vmatpush.msra.mxu0 0.0
    %209 = vmatpush.msra.mxu0 0.0
    %210 = vmatpush.msra.mxu0 0.0
    %211 = vmatpush.msra.mxu0 %v83
    %212 = vmatpush.msra.mxu0 %v82
    %213 = vmatmul.f32.gmra.mxu0 %v195
    %v214 = vpop.f32.mrf.mxu0
    %v215 = vadd.f32 0.0, %v214
    %216 = vdwg.mxu0
    %v217 = vadd.f32 %v193, %v215
    %v218 = vtanh.pop %v217
    %219 = vset.pattern.permute.xlu0 4
    %220 = vperm.xlu0 %219, %v85
    %v221 = vpop.permute.xlu0 %220
    %v223 = vmul.f32 %v221, %v93
    %v224 = vadd.f32 %v223, %v97
    %v226 = vsel %vm100, %v218, 0
    %228 = vmatpush.msra.mxu0 0.0
    %229 = vmatpush.msra.mxu0 0.0
    %230 = vmatpush.msra.mxu0 0.0
    %231 = vmatpush.msra.mxu0 0.0
    %232 = vmatpush.msra.mxu0 0.0
    %233 = vmatpush.msra.mxu0 0.0
    %234 = vmatpush.msra.mxu0 0.0
    %235 = vmatpush.msra.mxu0 0.0
    %236 = vmatpush.msra.mxu0 0.0
    %237 = vmatpush.msra.mxu0 0.0
    %238 = vmatpush.msra.mxu0 0.0
    %239 = vmatpush.msra.mxu0 0.0
    %240 = vmatpush.msra.mxu0 0.0
    %241 = vmatpush.msra.mxu0 0.0
    %242 = vmatpush.msra.mxu0 %v83
    %243 = vmatpush.msra.mxu0 %v82
    %244 = vmatmul.f32.gmra.mxu0 %v226
    %v245 = vpop.f32.mrf.mxu0
    %v246 = vadd.f32 0.0, %v245
    %247 = vdwg.mxu0
    %v248 = vadd.f32 %v224, %v246
    %v249 = vtanh.pop %v248
    %250 = vset.pattern.permute.xlu0 5
    %251 = vperm.xlu0 %250, %v85
    %v252 = vpop.permute.xlu0 %251
    %v254 = vmul.f32 %v252, %v93
    %v255 = vadd.f32 %v254, %v97
    %v257 = vsel %vm100, %v249, 0
    %259 = vmatpush.msra.mxu0 0.0
    %260 = vmatpush.msra.mxu0 0.0
    %261 = vmatpush.msra.mxu0 0.0
    %262 = vmatpush.msra.mxu0 0.0
    %263 = vmatpush.msra.mxu0 0.0
    %264 = vmatpush.msra.mxu0 0.0
    %265 = vmatpush.msra.mxu0 0.0
    %266 = vmatpush.msra.mxu0 0.0
    %267 = vmatpush.msra.mxu0 0.0
    %268 = vmatpush.msra.mxu0 0.0
    %269 = vmatpush.msra.mxu0 0.0
    %270 = vmatpush.msra.mxu0 0.0
    %271 = vmatpush.msra.mxu0 0.0
    %272 = vmatpush.msra.mxu0 0.0
    %273 = vmatpush.msra.mxu0 %v83
    %274 = vmatpush.msra.mxu0 %v82
    %275 = vmatmul.f32.gmra.mxu0 %v257
    %v276 = vpop.f32.mrf.mxu0
    %v277 = vadd.f32 0.0, %v276
    %278 = vdwg.mxu0
    %v279 = vadd.f32 %v255, %v277
    %v280 = vtanh.pop %v279
    %281 = vset.pattern.permute.xlu0 6
    %282 = vperm.xlu0 %281, %v85
    %v283 = vpop.permute.xlu0 %282
    %v285 = vmul.f32 %v283, %v93
    %v286 = vadd.f32 %v285, %v97
    %v288 = vsel %vm100, %v280, 0
    %290 = vmatpush.msra.mxu0 0.0
    %291 = vmatpush.msra.mxu0 0.0
    %292 = vmatpush.msra.mxu0 0.0
    %293 = vmatpush.msra.mxu0 0.0
    %294 = vmatpush.msra.mxu0 0.0
    %295 = vmatpush.msra.mxu0 0.0
    %296 = vmatpush.msra.mxu0 0.0
    %297 = vmatpush.msra.mxu0 0.0
    %298 = vmatpush.msra.mxu0 0.0
    %299 = vmatpush.msra.mxu0 0.0
    %300 = vmatpush.msra.mxu0 0.0
    %301 = vmatpush.msra.mxu0 0.0
    %302 = vmatpush.msra.mxu0 0.0
    %303 = vmatpush.msra.mxu0 0.0
    %304 = vmatpush.msra.mxu0 %v83
    %305 = vmatpush.msra.mxu0 %v82
    %306 = vmatmul.f32.gmra.mxu0 %v288
    %v307 = vpop.f32.mrf.mxu0
    %v308 = vadd.f32 0.0, %v307
    %309 = vdwg.mxu0
    %v310 = vadd.f32 %v286, %v308
    %v311 = vtanh.pop %v310
    %312 = vset.pattern.permute.xlu0 7
    %313 = vperm.xlu0 %312, %v85
    %v314 = vpop.permute.xlu0 %313
    %v316 = vmul.f32 %v314, %v93
    %v317 = vadd.f32 %v316, %v97
    %v319 = vsel %vm100, %v311, 0
    %321 = vmatpush.msra.mxu0 0.0
    %322 = vmatpush.msra.mxu0 0.0
    %323 = vmatpush.msra.mxu0 0.0
    %324 = vmatpush.msra.mxu0 0.0
    %325 = vmatpush.msra.mxu0 0.0
    %326 = vmatpush.msra.mxu0 0.0
    %327 = vmatpush.msra.mxu0 0.0
    %328 = vmatpush.msra.mxu0 0.0
    %329 = vmatpush.msra.mxu0 0.0
    %330 = vmatpush.msra.mxu0 0.0
    %331 = vmatpush.msra.mxu0 0.0
    %332 = vmatpush.msra.mxu0 0.0
    %333 = vmatpush.msra.mxu0 0.0
    %334 = vmatpush.msra.mxu0 0.0
    %335 = vmatpush.msra.mxu0 %v83
    %336 = vmatpush.msra.mxu0 %v82
    %337 = vmatmul.f32.gmra.mxu0 %v319
    %v338 = vpop.f32.mrf.mxu0
    %v339 = vadd.f32 0.0, %v338
    %340 = vdwg.mxu0
    %v341 = vadd.f32 %v317, %v339
    %v342 = vtanh.pop %v341
    %vm343 = vcmask 123904
    %344 = vst.msk [vmem:[#allocation2] sm:$0x3] %vm343, %v342
    // Predicated region
    $region46: #{tpu_custom_call.1} parent=1 // pred_check
      %p345 = pneg %p74
    $region47: #{tpu_custom_call.1} parent=1 // pred_check_branch
      %347 = sbr.rel (%p345) target = $region49
    $region48: #{tpu_custom_call.1} parent=1 // pred_region
      %348 = vst.msk [vmem:[#allocation10] sm:$0x3] %vm343, %v342
      %v349 = vld [vmem:[%s4] sm:$0x1]
      %v351 = vperm.slane %v349, 0
      %v353 = vmul.f32 %v342, %v351
      %v354 = vsel %vm343, %v353, 0.0
      %355 = vadd.xlane.f32.xlu0 %v354
      %v356 = vpop.xlane.xlu0 %355
      %v357 = vld [vmem:[#allocation3] sm:$0x1]
      %v359 = vperm.slane %v357, 0
      %v361 = vadd.f32 %v356, %v359
      %v362 = vxor.u32 %v361, 2147483648
      %v363 = vmul.f32 %v362, 1.442695
      %v364 = vpow.pop %v363
      %v365 = vadd.f32 %v364, 1.0
      %v366 = vrcp.pop %v365
      %v367 = vmul.f32 %v365, %v366
      %v368 = vsub.f32 1.0, %v367
      %v369 = vmul.f32 %v366, %v368
      %v370 = vadd.f32 %v366, %v369
      %vm371 = vweird.f32 %v365
      %vm372 = vweird.f32 %v366
      %vm373 = vmor %vm371, %vm372
      %v374 = vsel %vm373, %v366, %v370
      %v375 = vand.u32 2147483647, %v365
      %vm376 = vcmp.eq.f32.partialorder %v375, 8.507059e+37
      %v377 = vand.u32 %v365, 2147483648
      %v378 = vor.u32 1.1754944e-38, %v377
      %v379 = vsel %vm376, %v378, %v374
      %v380 = vmul.f32 1.0, %v379
      %vm381 = vcmask 1024
      %382 = vst.msk [vmem:[%s7] sm:$0x3] %vm381, %v380
    $region49: #{tpu_custom_call.1} parent=1 // pred_fallthru
      _
    // Predicated region
    $region50: #{tpu_custom_call.1} parent=1 // pred_check
      _
    $region51: #{tpu_custom_call.1} parent=1 // pred_check_branch
      %384 = sbr.rel (0) target = $region53
    $region52: #{tpu_custom_call.1} parent=1 // pred_region
      _
    $region53: #{tpu_custom_call.1} parent=1 // pred_fallthru
      _
    // Predicated region
    $region54: #{tpu_custom_call.1} parent=1 // pred_check
      _
    $region55: #{tpu_custom_call.1} parent=1 // pred_check_branch
      %386 = sbr.rel (0) target = $region57
    $region56: #{tpu_custom_call.1} parent=1 // pred_region
      %388 = vsyncadd [#allocation6], 0
      %s390 = sshll.u32 [#allocation10], 4
      %s391 = int_to_ptr.vmem [resolvable:$true] %s390
      %s392 = sshll.u32 %s8, 4
      %s393 = int_to_ptr.hbm [resolvable:$true] %s392
      %395 = dma.vmem_to_hbm [thread:$0]  %s391, 32, %s393, [#allocation6]
    $region57: #{tpu_custom_call.1} parent=1 // pred_fallthru
      _
    // Predicated region
    $region58: #{tpu_custom_call.1} parent=1 // pred_check
      _
    $region59: #{tpu_custom_call.1} parent=1 // pred_check_branch
      %397 = sbr.rel (0) target = $region61
    $region60: #{tpu_custom_call.1} parent=1 // pred_region
      _
    $region61: #{tpu_custom_call.1} parent=1 // pred_fallthru
      _
    // Predicated region
    $region62: #{tpu_custom_call.1} parent=1 // pred_check
      _
    $region63: #{tpu_custom_call.1} parent=1 // pred_check_branch
      %399 = sbr.rel (0) target = $region65
    $region64: #{tpu_custom_call.1} parent=1 // pred_region
      %401 = dma.done [#allocation6], 32
    $region65: #{tpu_custom_call.1} parent=1 // pred_fallthru
      _
    %402 = vsyncpa [#allocation5], 1
    %403 = vsyncpa [#allocation8], 1
    %404 = vsyncpa [#allocation6], 1

</llo_original>
